<compile_context>
chip_gen: v7x
topology: tpu7x:2x2x1
jax: 0.10.0
libtpu: 0.0.40
codegen_flags: <defaults>
</compile_context>

<pallas_src>
import math
import functools

import jax
import jax.numpy as jnp
from jax.experimental import pallas as pl
from jax.experimental.pallas import tpu as pltpu


LANE = 128
MAX_TILE_ROWS = 4096            # 4096 x 128: 2 MiB (f32) / 1 MiB (bf16) per block
SMALL_E_THRESHOLD = 256 * 1024  # below this, fused jnp beats a standalone kernel


def _cdiv(a, b):
    return -(-a // b)


def _round_up(x, m):
    return ((x + m - 1) // m) * m


def _sublane_for(dtype):
    # Min second-minor tile: 8 for 4-byte, 16 for 2-byte, 32 for 1-byte dtypes.
    itemsize = jnp.dtype(dtype).itemsize
    return max(8, 32 // max(1, itemsize))


def _num_tensorcores():
    """TensorCores per chip: 1 on v5e/v6e, 2 on v7x.  Queried defensively —
    attribute names vary across jax versions; fall back to 1 (always safe)."""
    try:
        info = pltpu.get_tpu_info()
    except Exception:
        return 1
    for attr in ("num_cores", "num_tensorcores", "tensor_cores_per_chip",
                 "cores_per_chip", "num_tensor_cores"):
        v = getattr(info, attr, None)
        if isinstance(v, int) and 1 <= v <= 8:
            return v
    return 1


def _cosine_cutoff_kernel(d_ref, o_ref, *, cutoff_lower, cutoff_upper):
    # Elementwise on a lane-dense [block_rows, 128] tile.  Compute in f32
    # (matches reference precision; safe on v5e which lacks bf16 VPU/EUP).
    d = d_ref[...].astype(jnp.float32)
    if cutoff_lower > 0:
        scale = 2.0 * math.pi / (cutoff_upper - cutoff_lower)
        arg = (d - cutoff_lower) * scale + math.pi
        c = 0.5 * (jnp.cos(arg) + 1.0)
        mask = (d < cutoff_upper) & (d > cutoff_lower)
    else:
        c = 0.5 * (jnp.cos(d * (math.pi / cutoff_upper)) + 1.0)
        mask = d < cutoff_upper
    o_ref[...] = jnp.where(mask, c, 0.0).astype(o_ref.dtype)


def _cosine_cutoff_jnp(d, cutoff_lower, cutoff_upper):
    # Fused XLA path: exactly one HBM read + one write (and it can further
    # fuse with producers/consumers of `d`, which a custom call cannot).
    if cutoff_lower > 0:
        c = 0.5 * (
            jnp.cos(
                math.pi
                * (2.0 * (d - cutoff_lower) / (cutoff_upper - cutoff_lower) + 1.0)
            )
            + 1.0
        )
        mask = (d < cutoff_upper) & (d > cutoff_lower)
    else:
        c = 0.5 * (jnp.cos(d * math.pi / cutoff_upper) + 1.0)
        mask = d < cutoff_upper
    return jnp.where(mask, c, jnp.zeros_like(c)).astype(d.dtype)


def cosine_cutoff(distances, cutoff_lower=0.0, cutoff_upper=5.0,
                  min_pallas_elements=SMALL_E_THRESHOLD):
    """Pallas TPU implementation of CosineCutoff.forward.

    distances: any-shaped float array (treated elementwise).
    Returns the same shape/dtype as the input, matching the PyTorch module.
    """
    orig_shape = distances.shape
    dtype = distances.dtype
    flat = distances.reshape(-1)          # metadata-only for contiguous arrays
    n = flat.shape[0]

    # Fast / fallback path:
    #  * small inputs: pallas_call fixed costs dwarf the work;
    #  * n % 128 != 0: the only way to feed the (rows,128) slab would be a
    #    pad or prefix-slice plus a trailing slice/concat — each a full extra
    #    HBM pass.  The fused jnp op is already at the roofline, so it is the
    #    faster choice for ragged sizes.
    if n < max(min_pallas_elements, 1) or n % LANE != 0:
        return _cosine_cutoff_jnp(flat, float(cutoff_lower),
                                  float(cutoff_upper)).reshape(orig_shape)

    rows = n // LANE
    slab = flat.reshape(rows, LANE)       # metadata-only reshape, no HBM pass

    sublane = _sublane_for(dtype)
    ncores = _num_tensorcores()

    # Block rows: as big as allowed (amortize ~0.35 us/grid-step), but keep at
    # least `ncores` grid steps so v7x's two TensorCores both get work.
    block_rows = _round_up(_cdiv(rows, max(1, ncores)), sublane)
    block_rows = min(block_rows, MAX_TILE_ROWS, _round_up(rows, sublane))
    block_rows = max(block_rows, sublane)
    grid = _cdiv(rows, block_rows)

    # On multi-TC chips make the step count a multiple of the TC count so the
    # megacore split is even (avoids e.g. a 3/2 tail imbalance on v7x).
    if ncores > 1 and grid > 1 and grid % ncores != 0:
        tgt = _round_up(grid, ncores)
        block_rows = _round_up(_cdiv(rows, tgt), sublane)
        block_rows = min(max(block_rows, sublane), MAX_TILE_ROWS)
        grid = _cdiv(rows, block_rows)

    kernel = functools.partial(
        _cosine_cutoff_kernel,
        cutoff_lower=float(cutoff_lower),
        cutoff_upper=float(cutoff_upper),
    )

    itemsize = jnp.dtype(dtype).itemsize
    cost = pl.CostEstimate(
        flops=8 * n,                 # cmp/sub/mul/add/select chain
        transcendentals=n,           # one cos per element
        bytes_accessed=2 * n * itemsize,
    )

    out = pl.pallas_call(
        kernel,
        out_shape=jax.ShapeDtypeStruct((rows, LANE), dtype),
        grid_spec=pltpu.PrefetchScalarGridSpec(
            num_scalar_prefetch=0,
            grid=(grid,),
            in_specs=[pl.BlockSpec((block_rows, LANE), lambda i: (i, 0))],
            out_specs=pl.BlockSpec((block_rows, LANE), lambda i: (i, 0)),
        ),
        compiler_params=pltpu.CompilerParams(
            dimension_semantics=("parallel",),
        ),
        cost_estimate=cost,
    )(slab)

    return out.reshape(orig_shape)


def _reference(distances, cutoff_lower=0.0, cutoff_upper=5.0):
    # Direct transcription of the PyTorch module.
    d = distances
    if cutoff_lower > 0:
        c = 0.5 * (
            jnp.cos(
                math.pi
                * (2.0 * (d - cutoff_lower) / (cutoff_upper - cutoff_lower) + 1.0)
            )
            + 1.0
        )
        c = c * (d < cutoff_upper)
        c = c * (d > cutoff_lower)
        return c
    c = 0.5 * (jnp.cos(d * math.pi / cutoff_upper) + 1.0)
    return c * (d < cutoff_upper)


if __name__ == "__main__":
    key = jax.random.PRNGKey(0)
    k0, k1, k2, k3, k4 = jax.random.split(key, 5)

    # 1) Small edge-distance vector (typical graph size) -> fused jnp fast path.
    d_small = jax.random.uniform(k0, (1000,), dtype=jnp.float32) * 7.0
    out0 = jax.block_until_ready(cosine_cutoff(d_small, 0.0, 5.0))
    assert jnp.allclose(out0, _reference(d_small, 0.0, 5.0), atol=1e-5, rtol=1e-5)

    # 2) 128-aligned multi-dim input -> Pallas path, both cutoff branches,
    #    no pad / slice / concat anywhere.
    d_nd = jax.random.uniform(k1, (2, 4, 16, 16), dtype=jnp.float32) * 7.0
    out1 = jax.block_until_ready(cosine_cutoff(d_nd, 0.0, 5.0, min_pallas_elements=0))
    assert out1.shape == d_nd.shape and out1.dtype == d_nd.dtype
    assert jnp.allclose(out1, _reference(d_nd, 0.0, 5.0), atol=1e-5, rtol=1e-5)
    out2 = jax.block_until_ready(cosine_cutoff(d_nd, 1.0, 5.0, min_pallas_elements=0))
    assert jnp.allclose(out2, _reference(d_nd, 1.0, 5.0), atol=1e-5, rtol=1e-5)

    # 3) 128-aligned but sublane-ragged row count (rows=100) -> Pallas path
    #    with a masked ragged last grid block.
    d_rag_rows = jax.random.uniform(k2, (100 * 128,), dtype=jnp.float32) * 7.0
    out3 = jax.block_until_ready(
        cosine_cutoff(d_rag_rows, 1.0, 5.0, min_pallas_elements=0))
    assert jnp.allclose(out3, _reference(d_rag_rows, 1.0, 5.0), atol=1e-5, rtol=1e-5)

    # 4) bf16 input -> Pallas path with 16-row sublane multiple, f32 compute.
    d_bf16 = (jax.random.uniform(k3, (4096,), dtype=jnp.float32) * 7.0).astype(jnp.bfloat16)
    out4 = jax.block_until_ready(
        cosine_cutoff(d_bf16, 0.0, 5.0, min_pallas_elements=0))
    ref4 = _reference(d_bf16.astype(jnp.float32), 0.0, 5.0).astype(jnp.bfloat16)
    assert out4.dtype == jnp.bfloat16
    assert jnp.allclose(out4.astype(jnp.float32), ref4.astype(jnp.float32), atol=1e-2)

    # 5) Ragged flat size (n % 128 != 0) -> documented fused-jnp fallback
    #    (minimal HBM traffic; no pad/slice around the custom call).
    d_ragged = jax.random.uniform(k4, (5000,), dtype=jnp.float32) * 7.0
    out5 = jax.block_until_ready(
        cosine_cutoff(d_ragged, 1.0, 5.0, min_pallas_elements=0))
    assert jnp.allclose(out5, _reference(d_ragged, 1.0, 5.0), atol=1e-5, rtol=1e-5)

    print("KERNEL_OK")
</pallas_src>

<mosaic_0001>
module attributes {stable_mosaic.version = 11 : i64} {
  func.func @_cosine_cutoff_kernel(%arg0: i32, %arg1: memref<16x128xf32, #tpu.memory_space<vmem>>, %arg2: memref<16x128xf32, #tpu.memory_space<vmem>>) attributes {dimension_semantics = [#tpu.dimension_semantics<parallel>], iteration_bounds = array<i64: 1>, scalar_prefetch = 0 : i64, scratch_operands = 0 : i64, tpu.core_type = #tpu.core_type<tc>, window_params = [{transform_indices = @transform_0, window_bounds = array<i64: 16, 128>}, {transform_indices = @transform_1, window_bounds = array<i64: 16, 128>}]} {
    %c0 = arith.constant 0 : index
    %c0_0 = arith.constant 0 : index
    %0 = vector.load %arg1[%c0, %c0_0] : memref<16x128xf32, #tpu.memory_space<vmem>>, vector<16x128xf32>
    %cst = arith.constant 0.628318548 : f32
    %1 = vector.broadcast %cst : f32 to vector<16x128xf32>
    %2 = arith.mulf %0, %1 : vector<16x128xf32>
    %3 = math.cos %2 : vector<16x128xf32>
    %cst_1 = arith.constant 1.000000e+00 : f32
    %4 = vector.broadcast %cst_1 : f32 to vector<16x128xf32>
    %5 = arith.addf %3, %4 : vector<16x128xf32>
    %cst_2 = arith.constant 5.000000e-01 : f32
    %6 = vector.broadcast %cst_2 : f32 to vector<16x128xf32>
    %7 = arith.mulf %6, %5 : vector<16x128xf32>
    %cst_3 = arith.constant 5.000000e+00 : f32
    %8 = vector.broadcast %cst_3 : f32 to vector<16x128xf32>
    %9 = arith.cmpf olt, %0, %8 : vector<16x128xf32>
    %cst_4 = arith.constant 0.000000e+00 : f32
    %10 = vector.broadcast %cst_4 : f32 to vector<16x128xf32>
    %11 = arith.select %9, %7, %10 : vector<16x128xi1>, vector<16x128xf32>
    %c0_5 = arith.constant 0 : index
    %c0_6 = arith.constant 0 : index
    %12 = vector.load %arg2[%c0_5, %c0_6] : memref<16x128xf32, #tpu.memory_space<vmem>>, vector<16x128xf32>
    tpu.vector_store %arg2[%c0_5, %c0_6], %11 {strides = array<i32>} : memref<16x128xf32, #tpu.memory_space<vmem>>, vector<16x128xf32>,
    return
  }
  func.func @transform_0(%arg0: i32) -> (i32, i32) {
    %c0_i32 = arith.constant 0 : i32
    %c0_i32_0 = arith.constant 0 : i32
    return %arg0, %c0_i32 : i32, i32
  }
  func.func @transform_1(%arg0: i32) -> (i32, i32) {
    %c0_i32 = arith.constant 0 : i32
    %c0_i32_0 = arith.constant 0 : i32
    return %arg0, %c0_i32 : i32, i32
  }
}

</mosaic_0001>

<llo_original>
// kernel: tpu_custom_call.1
$region0: #{tpu_custom_call.1}
  #allocation0 [shape = 'u32[]', space=smem, size = 0x4, offset = 0x4, fixed_abs, tag = 'smem constant byte address 0x4 - core index']
  #allocation1 [shape = 'u32[144,128]{1,0:T(1,128)}', space=vmem, size = 0x12000, scoped, tag = 'internal scratch']
  %s0 = inlined_call_operand.hbm [shape: f32[16,128], index: 0, kind: input, shape index: {}]
  %s1 = inlined_call_operand.hbm [shape: f32[16,128], index: 1, kind: output, shape index: {}]
  %s2 = sld [smem:[#allocation0]]
  $region18: #{tpu_custom_call.1} parent=0
    _
  %s4 = ssub.s32 1, %s2
  %s5 = scalar_select 0, %s4, %s2
  $region1: #{tpu_custom_call.1} parent=0
    #allocation2 [shape = 'u8[8192]{0}', space=vmem, size = 0x2000, scoped, tag = 'input window, operand 0, single buffered']
    #allocation3 [shape = 's32[1]{0}', space=sflag, size = 0x4, scoped, tag = 'scoped memory for tpu_custom_call.1']
    #allocation4 [shape = 's32[1]{0}', space=sflag, size = 0x4, scoped, tag = 'scoped memory for tpu_custom_call.1']
    #allocation5 [shape = 'u8[8192]{0}', space=vmem, size = 0x2000, scoped, tag = 'output window, operand 0, single buffered']
    %6 = vsyncpa [#allocation3], 0
    %7 = vsyncpa [#allocation4], 0
    // Predicated region
    $region2: #{tpu_custom_call.1} parent=1 // pred_check
      _
    $region3: #{tpu_custom_call.1} parent=1 // pred_check_branch
      %9 = sbr.rel (0) target = $region5
    $region4: #{tpu_custom_call.1} parent=1 // pred_region
      %s11 = ssub.s32 256, 256
      %12 = vsyncadd [#allocation3], %s11
      %s13 = sshll.u32 [#allocation2], 4
      %s14 = int_to_ptr.vmem [resolvable:$true] %s13
      %19 = dma.hbm_to_vmem [thread:$0]  %s0, 256, %s14, [#allocation3], 128, 128, 8
    $region5: #{tpu_custom_call.1} parent=1 // pred_fallthru
      _
    // Predicated region
    $region6: #{tpu_custom_call.1} parent=1 // pred_check
      _
    $region7: #{tpu_custom_call.1} parent=1 // pred_check_branch
      %21 = sbr.rel (0) target = $region9
    $region8: #{tpu_custom_call.1} parent=1 // pred_region
      %22 = dma.done [#allocation3], 256
    $region9: #{tpu_custom_call.1} parent=1 // pred_fallthru
      _
    %v23 = vld [vmem:[#allocation2] sm:$0xff]
    %v24 = vld [vmem:[#allocation2 + $0x8] sm:$0xff]
    %v25 = vmul.f32 %v23, 0.62831855
    %v26 = vmul.f32 %v24, 0.62831855
    %v27 = vand.u32 2147483647, %v25
    %vm28 = vcmp.le.f32.partialorder %v27, 0.7853982
    %vm29 = vcmp.lt.s32.totalorder %v25, 0
    %v30 = vand.u32 %v25, 2139095040
    %v31 = vshrl.u32 %v30, 23
    %v32 = vsub.s32 %v31, 127
    %v33 = vand.u32 2147483647, %v25
    %v34 = vand.u32 %v33, 8388607
    %v35 = vor.u32 %v34, 8388608
    %v36 = vsub.s32 0, %v35
    %v37 = vadd.s32 %v32, 1
    %vm38 = vcmp.gt.s32.totalorder %v37, 0
    %v39 = vsel %vm38, %v37, 0
    %v40 = vshrl.u32 %v39, 5
    %v41 = vand.u32 %v39, 31
    %v42 = vsub.s32 32, %v41
    %v43 = vshrl.u32 683565275, %v42
    %v44 = vshll.u32 683565275, %v41
    %v45 = vshrl.u32 2475754826, %v42
    %v46 = vor.u32 %v44, %v45
    %v47 = vshll.u32 2475754826, %v41
    %v48 = vshrl.u32 2131351028, %v42
    %v49 = vor.u32 %v47, %v48
    %v50 = vshll.u32 2131351028, %v41
    %v51 = vshrl.u32 2102212464, %v42
    %v52 = vor.u32 %v50, %v51
    %v53 = vshll.u32 2102212464, %v41
    %v54 = vshrl.u32 920167782, %v42
    %v55 = vor.u32 %v53, %v54
    %v56 = vshll.u32 920167782, %v41
    %v57 = vshrl.u32 1326507024, %v42
    %v58 = vor.u32 %v56, %v57
    %vm59 = vcmp.lt.s32.totalorder %v40, 1
    %vm60 = vcmp.lt.s32.totalorder %v40, 2
    %vm61 = vcmp.lt.s32.totalorder %v40, 3
    %vm62 = vcmp.lt.s32.totalorder %v40, 4
    %v63 = vsel %vm59, %v43, %v46
    %v64 = vsel %vm62, %v52, 2102212464
    %v65 = vsel %vm61, %v49, %v64
    %v66 = vsel %vm60, %v63, %v65
    %v67 = vsel %vm59, %v46, %v49
    %v68 = vsel %vm62, %v55, 920167782
    %v69 = vsel %vm61, %v52, %v68
    %v70 = vsel %vm60, %v67, %v69
    %v71 = vsel %vm59, %v49, %v52
    %v72 = vsel %vm62, %v58, 1326507024
    %v73 = vsel %vm61, %v55, %v72
    %v74 = vsel %vm60, %v71, %v73
    %v75 = vshll.u32 %v35, 8
    %v76 = vmul.u32.u64.compose %v75, %v74
    %v77 = vextract.low.u32 %v76
    %v78 = vextract.high.u32 %v76
    %v79 = vmul.u32.u64.compose %v75, %v70
    %v80 = vextract.low.u32 %v79
    %v81 = vextract.high.u32 %v79
    %v82 = vmul.u32 %v75, %v66
    %v83 = vadd.s32 %v78, %v80
    %vm84 = vc.u32 %v78, %v80
    %v85 = vadd.s32 %v81, 1
    %v86 = vsel %vm84, %v85, %v81
    %v87 = vadd.s32 %v82, %v86
    %v88 = vadd.s32 %v87, 536870912
    %v89 = vshrl.u32 %v88, 30
    %v90 = vshll.u32 %v89, 30
    %v91 = vsub.s32 %v87, %v90
    %vm92 = vcmp.lt.s32.totalorder %v91, 0
    %v93 = vsub.s32 0, %v91
    %v94 = vsel %vm92, %v93, %v91
    %v95 = vclz %v94
    %v96 = vsub.s32 %v95, 2
    %vm97 = vcmp.gt.s32.totalorder 0, %v96
    %v98 = vsel %vm97, 0, %v96
    %v99 = vsub.s32 32, %v98
    %v100 = vshll.u32 %v91, %v98
    %v101 = vshrl.u32 %v83, %v99
    %v102 = vor.u32 %v100, %v101
    %v103 = vsub.s32 4294967266, %v98
    %v104 = vadd.s32 %v103, 127
    %v105 = vshll.u32 %v104, 23
    %v106 = vor.u32 4788187, %v105
    %v107 = vand.u32 2147483647, %v106
    %v109 = vcvt.s32.f32 %v102
    %v110 = vmul.f32 %v109, %v107
    %v111 = vxor.u32 %v110, 2147483648
    %v112 = vsel %vm29, %v111, %v110
    %v113 = vsub.s32 4, %v89
    %v114 = vsel %vm29, %v113, %v89
    %v115 = vsel %vm28, %v25, %v112
    %v116 = vsel %vm28, 0, %v114
    %v117 = vcosq.f32.pop %v115
    %v118 = vsinq.f32.pop %v115
    %vm119 = vweird.f32 %v25
    %v120 = vand.u32 %v116, 3
    %vm121 = vcmp.lt.s32.totalorder %v120, 2
    %vm122 = vcmp.eq.s32.totalorder %v120, 0
    %v123 = vxor.u32 %v118, 2147483648
    %v124 = vsel %vm122, %v117, %v123
    %vm125 = vcmp.eq.s32.totalorder %v120, 2
    %v126 = vxor.u32 %v117, 2147483648
    %v127 = vsel %vm125, %v126, %v118
    %v128 = vsel %vm121, %v124, %v127
    %v129 = vsel %vm119, nan, %v128
    %v130 = vand.u32 2147483647, %v26
    %vm131 = vcmp.le.f32.partialorder %v130, 0.7853982
    %vm132 = vcmp.lt.s32.totalorder %v26, 0
    %v133 = vand.u32 %v26, 2139095040
    %v134 = vshrl.u32 %v133, 23
    %v135 = vsub.s32 %v134, 127
    %v136 = vand.u32 2147483647, %v26
    %v137 = vand.u32 %v136, 8388607
    %v138 = vor.u32 %v137, 8388608
    %v139 = vsub.s32 0, %v138
    %v140 = vadd.s32 %v135, 1
    %vm141 = vcmp.gt.s32.totalorder %v140, 0
    %v142 = vsel %vm141, %v140, 0
    %v143 = vshrl.u32 %v142, 5
    %v144 = vand.u32 %v142, 31
    %v145 = vsub.s32 32, %v144
    %v146 = vshrl.u32 683565275, %v145
    %v147 = vshll.u32 683565275, %v144
    %v148 = vshrl.u32 2475754826, %v145
    %v149 = vor.u32 %v147, %v148
    %v150 = vshll.u32 2475754826, %v144
    %v151 = vshrl.u32 2131351028, %v145
    %v152 = vor.u32 %v150, %v151
    %v153 = vshll.u32 2131351028, %v144
    %v154 = vshrl.u32 2102212464, %v145
    %v155 = vor.u32 %v153, %v154
    %v156 = vshll.u32 2102212464, %v144
    %v157 = vshrl.u32 920167782, %v145
    %v158 = vor.u32 %v156, %v157
    %v159 = vshll.u32 920167782, %v144
    %v160 = vshrl.u32 1326507024, %v145
    %v161 = vor.u32 %v159, %v160
    %vm162 = vcmp.lt.s32.totalorder %v143, 1
    %vm163 = vcmp.lt.s32.totalorder %v143, 2
    %vm164 = vcmp.lt.s32.totalorder %v143, 3
    %vm165 = vcmp.lt.s32.totalorder %v143, 4
    %v166 = vsel %vm162, %v146, %v149
    %v167 = vsel %vm165, %v155, 2102212464
    %v168 = vsel %vm164, %v152, %v167
    %v169 = vsel %vm163, %v166, %v168
    %v170 = vsel %vm162, %v149, %v152
    %v171 = vsel %vm165, %v158, 920167782
    %v172 = vsel %vm164, %v155, %v171
    %v173 = vsel %vm163, %v170, %v172
    %v174 = vsel %vm162, %v152, %v155
    %v175 = vsel %vm165, %v161, 1326507024
    %v176 = vsel %vm164, %v158, %v175
    %v177 = vsel %vm163, %v174, %v176
    %v178 = vshll.u32 %v138, 8
    %v179 = vmul.u32.u64.compose %v178, %v177
    %v180 = vextract.low.u32 %v179
    %v181 = vextract.high.u32 %v179
    %v182 = vmul.u32.u64.compose %v178, %v173
    %v183 = vextract.low.u32 %v182
    %v184 = vextract.high.u32 %v182
    %v185 = vmul.u32 %v178, %v169
    %v186 = vadd.s32 %v181, %v183
    %vm187 = vc.u32 %v181, %v183
    %v188 = vadd.s32 %v184, 1
    %v189 = vsel %vm187, %v188, %v184
    %v190 = vadd.s32 %v185, %v189
    %v191 = vadd.s32 %v190, 536870912
    %v192 = vshrl.u32 %v191, 30
    %v193 = vshll.u32 %v192, 30
    %v194 = vsub.s32 %v190, %v193
    %vm195 = vcmp.lt.s32.totalorder %v194, 0
    %v196 = vsub.s32 0, %v194
    %v197 = vsel %vm195, %v196, %v194
    %v198 = vclz %v197
    %v199 = vsub.s32 %v198, 2
    %vm200 = vcmp.gt.s32.totalorder 0, %v199
    %v201 = vsel %vm200, 0, %v199
    %v202 = vsub.s32 32, %v201
    %v203 = vshll.u32 %v194, %v201
    %v204 = vshrl.u32 %v186, %v202
    %v205 = vor.u32 %v203, %v204
    %v206 = vsub.s32 4294967266, %v201
    %v207 = vadd.s32 %v206, 127
    %v208 = vshll.u32 %v207, 23
    %v209 = vor.u32 4788187, %v208
    %v210 = vand.u32 2147483647, %v209
    %v212 = vcvt.s32.f32 %v205
    %v213 = vmul.f32 %v212, %v210
    %v214 = vxor.u32 %v213, 2147483648
    %v215 = vsel %vm132, %v214, %v213
    %v216 = vsub.s32 4, %v192
    %v217 = vsel %vm132, %v216, %v192
    %v218 = vsel %vm131, %v26, %v215
    %v219 = vsel %vm131, 0, %v217
    %v220 = vcosq.f32.pop %v218
    %v221 = vsinq.f32.pop %v218
    %vm222 = vweird.f32 %v26
    %v223 = vand.u32 %v219, 3
    %vm224 = vcmp.lt.s32.totalorder %v223, 2
    %vm225 = vcmp.eq.s32.totalorder %v223, 0
    %v226 = vxor.u32 %v221, 2147483648
    %v227 = vsel %vm225, %v220, %v226
    %vm228 = vcmp.eq.s32.totalorder %v223, 2
    %v229 = vxor.u32 %v220, 2147483648
    %v230 = vsel %vm228, %v229, %v221
    %v231 = vsel %vm224, %v227, %v230
    %v232 = vsel %vm222, nan, %v231
    %v233 = vadd.f32 %v129, 1.0
    %v234 = vadd.f32 %v232, 1.0
    %v235 = vmul.f32 %v233, 0.5
    %v236 = vmul.f32 %v234, 0.5
    %vm237 = vcmp.lt.f32.partialorder %v23, 5.0
    %vm238 = vcmp.lt.f32.partialorder %v24, 5.0
    %v239 = vsel %vm237, %v235, 0.0
    %v240 = vsel %vm238, %v236, 0.0
    %241 = vst [vmem:[#allocation5] sm:$0xff] %v239
    %242 = vst [vmem:[#allocation5 + $0x8] sm:$0xff] %v240
    // Predicated region
    $region10: #{tpu_custom_call.1} parent=1 // pred_check
      _
    $region11: #{tpu_custom_call.1} parent=1 // pred_check_branch
      %244 = sbr.rel (0) target = $region13
    $region12: #{tpu_custom_call.1} parent=1 // pred_region
      %s246 = ssub.s32 256, 256
      %247 = vsyncadd [#allocation4], %s246
      %s248 = sshll.u32 [#allocation5], 4
      %s249 = int_to_ptr.vmem [resolvable:$true] %s248
      %254 = dma.vmem_to_hbm [thread:$0]  %s249, 256, %s1, [#allocation4], 128, 128, 8
    $region13: #{tpu_custom_call.1} parent=1 // pred_fallthru
      _
    // Predicated region
    $region14: #{tpu_custom_call.1} parent=1 // pred_check
      _
    $region15: #{tpu_custom_call.1} parent=1 // pred_check_branch
      %256 = sbr.rel (0) target = $region17
    $region16: #{tpu_custom_call.1} parent=1 // pred_region
      %257 = dma.done [#allocation4], 256
    $region17: #{tpu_custom_call.1} parent=1 // pred_fallthru
      _
    %258 = vsyncpa [#allocation3], 1
    %259 = vsyncpa [#allocation4], 1

</llo_original>
